<compile_context>
chip_gen: v7x
topology: tpu7x:2x2x1
jax: 0.10.0
libtpu: 0.0.40
codegen_flags: <defaults>
</compile_context>

<pallas_src>
import jax
import jax.numpy as jnp
from jax import lax
from jax.experimental import pallas as pl
from jax.experimental.pallas import tpu as pltpu


def _round_up(v: int, m: int) -> int:
    return ((v + m - 1) // m) * m


def _cdiv(a: int, b: int) -> int:
    return -(-a // b)


# --------------------------------------------------------------------------- #
# Kernels
# --------------------------------------------------------------------------- #
def _kernel_acc_bias(x_ref, w_ref, b_ref, o_ref, acc_ref):
    """Multi-K-step tile: f32 VMEM accumulator, bias added once in epilogue."""
    k = pl.program_id(2)

    @pl.when(k == 0)
    def _init():
        acc_ref[...] = jnp.zeros_like(acc_ref)

    acc_ref[...] += jnp.dot(
        x_ref[...], w_ref[...], preferred_element_type=jnp.float32
    )

    @pl.when(k == pl.num_programs(2) - 1)
    def _finalize():
        o_ref[...] = (acc_ref[...] + b_ref[...]).astype(o_ref.dtype)


def _kernel_acc_nobias(x_ref, w_ref, o_ref, acc_ref):
    k = pl.program_id(2)

    @pl.when(k == 0)
    def _init():
        acc_ref[...] = jnp.zeros_like(acc_ref)

    acc_ref[...] += jnp.dot(
        x_ref[...], w_ref[...], preferred_element_type=jnp.float32
    )

    @pl.when(k == pl.num_programs(2) - 1)
    def _finalize():
        o_ref[...] = acc_ref[...].astype(o_ref.dtype)


def _kernel_single_bias(x_ref, w_ref, b_ref, o_ref):
    """Whole-K-in-one-tile: no scratch accumulator, no pl.when overhead."""
    o_ref[...] = (
        jnp.dot(x_ref[...], w_ref[...], preferred_element_type=jnp.float32)
        + b_ref[...]
    ).astype(o_ref.dtype)


def _kernel_single_nobias(x_ref, w_ref, o_ref):
    o_ref[...] = jnp.dot(
        x_ref[...], w_ref[...], preferred_element_type=jnp.float32
    ).astype(o_ref.dtype)


# --------------------------------------------------------------------------- #
# Wrapper: prepare weight layout once, return a fast per-call apply(x)
# --------------------------------------------------------------------------- #
def make_linear(weight, bias=None, *, max_tm=512, max_tn=512, max_tk=1024,
                compute_dtype=jnp.float32):
    """weight: (N, K), bias: (N,) or None.  Returns fn(x: (B, K)) -> (B, N) f32."""
    weight = jnp.asarray(weight, jnp.float32)
    N, K = weight.shape
    has_bias = bias is not None

    # ---- tile selection (independent of batch size) --------------------------
    tn = min(max_tn, _round_up(N, 128))
    # If a single N tile would cover the whole layer, split it so the
    # "parallel" grid can shard across v7x's two TensorCores.
    if _cdiv(N, tn) == 1 and tn > 128:
        tn = _round_up(tn // 2, 128)
    Np = _round_up(N, tn)

    if K <= max_tk:
        tk = K                      # single reduction step, no K padding at all
    else:
        tk = max_tk
        for cand in (1024, 512, 256, 128):
            if cand <= max_tk and K % cand == 0:
                tk = cand
                break
    Kp = _round_up(K, tk)
    nk = Kp // tk

    in_itemsize = jnp.dtype(compute_dtype).itemsize

    # ---- one-time parameter layout prep (hoisted out of the per-call path) ---
    # (Kp, Np): lane-dense in N, zero-padded so padded K rows contribute 0.
    w_t = jnp.pad(weight.T, ((0, Kp - K), (0, Np - N))).astype(compute_dtype)
    if has_bias:
        bias = jnp.asarray(bias, jnp.float32)
        b_p = jnp.pad(bias.reshape(1, N), ((0, 0), (0, Np - N)))
    else:
        b_p = None

    def _apply(x, w_arg, b_arg):
        assert x.ndim == 2 and x.shape[1] == K, "input must be (batch, in_features)"
        B = x.shape[0]

        tm = min(max_tm, _round_up(B, 8))
        gm = _cdiv(B, tm)
        gn = Np // tn

        x_in = jnp.asarray(x, jnp.float32)
        if Kp != K:
            # Zero-pad ONLY the reduction axis (garbage K corrupts the sum).
            x_in = jnp.pad(x_in, ((0, 0), (0, Kp - K)))
        x_in = x_in.astype(compute_dtype)

        # ---- accurate VMEM budget: double-buffered tiles + accumulator -------
        footprint = (
            2 * tm * tk * in_itemsize          # x tiles (double-buffered)
            + 2 * tk * tn * in_itemsize        # weight tiles
            + 2 * tm * tn * 4                  # output tiles
            + (tm * tn * 4 if nk > 1 else 0)   # accumulator scratch
            + (2 * tn * 4 if has_bias else 0)  # bias tiles
        )
        vmem_limit = int(min(max(footprint + 8 * 1024 * 1024,
                                 16 * 1024 * 1024), 48 * 1024 * 1024))

        cost = pl.CostEstimate(
            flops=2 * B * K * N,
            transcendentals=0,
            bytes_accessed=4 * (gn * B * Kp + gm * Kp * Np + B * N),
        )

        out_shape = jax.ShapeDtypeStruct((B, N), jnp.float32)

        if nk == 1:
            grid = (gm, gn)
            x_spec = pl.BlockSpec((tm, tk), lambda i, j: (i, 0))
            w_spec = pl.BlockSpec((tk, tn), lambda i, j: (0, j))
            b_spec = pl.BlockSpec((1, tn), lambda i, j: (0, j))
            o_spec = pl.BlockSpec((tm, tn), lambda i, j: (i, j))
            kernel = _kernel_single_bias if has_bias else _kernel_single_nobias
            scratch = []
            dims = ("parallel", "parallel")
        else:
            grid = (gm, gn, nk)                 # reduction axis last
            x_spec = pl.BlockSpec((tm, tk), lambda i, j, k: (i, k))
            w_spec = pl.BlockSpec((tk, tn), lambda i, j, k: (k, j))
            b_spec = pl.BlockSpec((1, tn), lambda i, j, k: (0, j))
            o_spec = pl.BlockSpec((tm, tn), lambda i, j, k: (i, j))
            kernel = _kernel_acc_bias if has_bias else _kernel_acc_nobias
            scratch = [pltpu.VMEM((tm, tn), jnp.float32)]
            dims = ("parallel", "parallel", "arbitrary")

        in_specs = [x_spec, w_spec] + ([b_spec] if has_bias else [])
        args = (x_in, w_arg) + ((b_arg,) if has_bias else ())

        return pl.pallas_call(
            kernel,
            out_shape=out_shape,
            grid_spec=pltpu.PrefetchScalarGridSpec(
                num_scalar_prefetch=0,
                grid=grid,
                in_specs=in_specs,
                out_specs=o_spec,
                scratch_shapes=scratch,
            ),
            compiler_params=pltpu.CompilerParams(
                dimension_semantics=dims,
                vmem_limit_bytes=vmem_limit,
            ),
            cost_estimate=cost,
        )(*args)

    _apply_jit = jax.jit(_apply)

    def fn(x):
        return _apply_jit(x, w_t, b_p)

    return fn


def linear(x, weight, bias=None):
    """One-shot convenience wrapper (weight prep not amortized across calls)."""
    return make_linear(weight, bias)(x)


# --------------------------------------------------------------------------- #
# Self-test
# --------------------------------------------------------------------------- #
if __name__ == "__main__":
    key = jax.random.PRNGKey(0)
    k_x1, k_w1, k_b1, k_x2, k_w2 = jax.random.split(key, 5)

    # Case 1: tiny layer with bias -> single-K-step kernel (no accumulator).
    B1, K1, N1 = 2, 32, 16
    x1 = jax.random.normal(k_x1, (B1, K1), dtype=jnp.float32)
    w1 = jax.random.normal(k_w1, (N1, K1), dtype=jnp.float32) * 0.1
    b1 = jax.random.normal(k_b1, (N1,), dtype=jnp.float32) * 0.1

    lin1 = make_linear(w1, b1)
    y1 = lin1(x1)
    jax.block_until_ready(y1)

    ref1 = jnp.dot(x1, w1.T, precision=lax.Precision.HIGHEST) + b1[None, :]
    assert y1.shape == ref1.shape, "case1: shape mismatch vs reference"
    assert jnp.allclose(y1, ref1, atol=1e-5, rtol=1e-5), "case1: mismatch vs reference"

    # Case 2: no bias, reduction split over the K grid axis (accumulator path).
    B2, K2, N2 = 16, 256, 48
    x2 = jax.random.normal(k_x2, (B2, K2), dtype=jnp.float32)
    w2 = jax.random.normal(k_w2, (N2, K2), dtype=jnp.float32) * 0.05

    lin2 = make_linear(w2, None, max_tk=128)   # force 2 K steps
    y2 = lin2(x2)
    jax.block_until_ready(y2)

    ref2 = jnp.dot(x2, w2.T, precision=lax.Precision.HIGHEST)
    assert y2.shape == ref2.shape, "case2: shape mismatch vs reference"
    assert jnp.allclose(y2, ref2, atol=1e-3, rtol=1e-3), "case2: mismatch vs reference"

    print("KERNEL_OK")
</pallas_src>

<mosaic_0001>
module attributes {stable_mosaic.version = 11 : i64} {
  func.func @_kernel_single_bias(%arg0: i32, %arg1: i32, %arg2: memref<8x32xf32, #tpu.memory_space<vmem>>, %arg3: memref<32x128xf32, #tpu.memory_space<vmem>>, %arg4: memref<1x128xf32, #tpu.memory_space<vmem>>, %arg5: memref<8x128xf32, #tpu.memory_space<vmem>>) attributes {dimension_semantics = [#tpu.dimension_semantics<parallel>, #tpu.dimension_semantics<parallel>], iteration_bounds = array<i64: 1, 1>, scalar_prefetch = 0 : i64, scratch_operands = 0 : i64, tpu.core_type = #tpu.core_type<tc>, window_params = [{transform_indices = @transform_0, window_bounds = array<i64: 8, 32>}, {transform_indices = @transform_1, window_bounds = array<i64: 32, 128>}, {transform_indices = @transform_2, window_bounds = array<i64: 1, 128>}, {transform_indices = @transform_3, window_bounds = array<i64: 8, 128>}]} {
    %c0 = arith.constant 0 : index
    %c0_0 = arith.constant 0 : index
    %0 = vector.load %arg2[%c0, %c0_0] : memref<8x32xf32, #tpu.memory_space<vmem>>, vector<8x32xf32>
    %c0_1 = arith.constant 0 : index
    %c0_2 = arith.constant 0 : index
    %1 = vector.load %arg3[%c0_1, %c0_2] : memref<32x128xf32, #tpu.memory_space<vmem>>, vector<32x128xf32>
    %cst = arith.constant dense<0.000000e+00> : vector<8x128xf32>
    %2 = tpu.matmul %0, %1, %cst {dimension_numbers = #tpu.dot_dimension_numbers<[1], [0], [0], [1], [0, 0, 1, 1], [], []>} : vector<8x32xf32>, vector<32x128xf32>, vector<8x128xf32> -> vector<8x128xf32>
    %c0_3 = arith.constant 0 : index
    %c0_4 = arith.constant 0 : index
    %3 = vector.load %arg4[%c0_3, %c0_4] : memref<1x128xf32, #tpu.memory_space<vmem>>, vector<1x128xf32>
    %4 = vector.broadcast %3 : vector<1x128xf32> to vector<8x128xf32>
    %5 = arith.addf %2, %4 : vector<8x128xf32>
    %c0_5 = arith.constant 0 : index
    %c0_6 = arith.constant 0 : index
    %6 = vector.load %arg5[%c0_5, %c0_6] : memref<8x128xf32, #tpu.memory_space<vmem>>, vector<8x128xf32>
    tpu.vector_store %arg5[%c0_5, %c0_6], %5 {strides = array<i32>} : memref<8x128xf32, #tpu.memory_space<vmem>>, vector<8x128xf32>,
    return
  }
  func.func @transform_0(%arg0: i32, %arg1: i32) -> (i32, i32) {
    %c0_i32 = arith.constant 0 : i32
    %c0_i32_0 = arith.constant 0 : i32
    return %arg0, %c0_i32 : i32, i32
  }
  func.func @transform_1(%arg0: i32, %arg1: i32) -> (i32, i32) {
    %c0_i32 = arith.constant 0 : i32
    %c0_i32_0 = arith.constant 0 : i32
    return %c0_i32, %arg1 : i32, i32
  }
  func.func @transform_2(%arg0: i32, %arg1: i32) -> (i32, i32) {
    %c0_i32 = arith.constant 0 : i32
    %c0_i32_0 = arith.constant 0 : i32
    return %c0_i32, %arg1 : i32, i32
  }
  func.func @transform_3(%arg0: i32, %arg1: i32) -> (i32, i32) {
    %c0_i32 = arith.constant 0 : i32
    return %arg0, %arg1 : i32, i32
  }
}

</mosaic_0001>

<llo_original>
// kernel: _apply.1
$region0: #{_apply.1}
  #allocation0 [shape = 'u32[]', space=smem, size = 0x4, offset = 0x4, fixed_abs, tag = 'smem constant byte address 0x4 - core index']
  #allocation1 [shape = 'u32[144,128]{1,0:T(1,128)}', space=vmem, size = 0x12000, scoped, tag = 'internal scratch']
  %s0 = inlined_call_operand.hbm [shape: f32[2,32], index: 0, kind: input, shape index: {}]
  %s1 = inlined_call_operand.hbm [shape: f32[32,128], index: 1, kind: input, shape index: {}]
  %s2 = inlined_call_operand.vmem [shape: f32[1,128], index: 2, kind: input, shape index: {}]
  %s3 = inlined_call_operand.hbm [shape: f32[2,16], index: 3, kind: output, shape index: {}]
  %s4 = sld [smem:[#allocation0]]
  $region30: #{_apply.1} parent=0
    _
  %s6 = ssub.s32 1, %s4
  %s7 = scalar_select 0, %s6, %s4
  $region1: #{_apply.1} parent=0
    #allocation2 [shape = 'u8[4096]{0}', space=vmem, size = 0x1000, scoped, tag = 'input window, operand 0, single buffered']
    #allocation3 [shape = 's32[1]{0}', space=sflag, size = 0x4, scoped, tag = 'scoped memory for _apply.1']
    #allocation4 [shape = 's32[1]{0}', space=sflag, size = 0x4, scoped, tag = 'scoped memory for _apply.1']
    #allocation5 [shape = 'u8[16384]{0}', space=vmem, size = 0x4000, scoped, tag = 'input window, operand 1, single buffered']
    #allocation6 [shape = 's32[1]{0}', space=sflag, size = 0x4, scoped, tag = 'scoped memory for _apply.1']
    #allocation7 [shape = 'u8[4096]{0}', space=vmem, size = 0x1000, scoped, tag = 'output window, operand 0, single buffered']
    %8 = vsyncpa [#allocation3], 0
    %9 = vsyncpa [#allocation6], 0
    %10 = vsyncpa [#allocation4], 0
    // Predicated region
    $region2: #{_apply.1} parent=1 // pred_check
      _
    $region3: #{_apply.1} parent=1 // pred_check_branch
      %12 = sbr.rel (0) target = $region5
    $region4: #{_apply.1} parent=1 // pred_region
      %s14 = ssub.s32 128, 32
      %15 = vsyncadd [#allocation3], %s14
      %s16 = sshll.u32 [#allocation2], 4
      %s17 = int_to_ptr.vmem [resolvable:$true] %s16
      %22 = dma.hbm_to_vmem [thread:$0]  %s0, 32, %s17, [#allocation3], 32, 32, 2
    $region5: #{_apply.1} parent=1 // pred_fallthru
      _
    // Predicated region
    $region6: #{_apply.1} parent=1 // pred_check
      _
    $region7: #{_apply.1} parent=1 // pred_check_branch
      %24 = sbr.rel (0) target = $region9
    $region8: #{_apply.1} parent=1 // pred_region
      %s26 = ssub.s32 512, 512
      %27 = vsyncadd [#allocation6], %s26
      %s28 = sshll.u32 [#allocation5], 4
      %s29 = int_to_ptr.vmem [resolvable:$true] %s28
      %34 = dma.hbm_to_vmem [thread:$0]  %s1, 512, %s29, [#allocation6], 128, 128, 8
    $region9: #{_apply.1} parent=1 // pred_fallthru
      _
    // Predicated region
    $region10: #{_apply.1} parent=1 // pred_check
      _
    $region11: #{_apply.1} parent=1 // pred_check_branch
      %36 = sbr.rel (0) target = $region13
    $region12: #{_apply.1} parent=1 // pred_region
      _
    $region13: #{_apply.1} parent=1 // pred_fallthru
      _
    // Predicated region
    $region14: #{_apply.1} parent=1 // pred_check
      _
    $region15: #{_apply.1} parent=1 // pred_check_branch
      %38 = sbr.rel (0) target = $region17
    $region16: #{_apply.1} parent=1 // pred_region
      %39 = dma.done [#allocation3], 128
    $region17: #{_apply.1} parent=1 // pred_fallthru
      _
    // Predicated region
    $region18: #{_apply.1} parent=1 // pred_check
      _
    $region19: #{_apply.1} parent=1 // pred_check_branch
      %41 = sbr.rel (0) target = $region21
    $region20: #{_apply.1} parent=1 // pred_region
      %42 = dma.done [#allocation6], 512
    $region21: #{_apply.1} parent=1 // pred_fallthru
      _
    %v43 = vld [vmem:[#allocation2] sm:$0xff]
    %v44 = vld [vmem:[#allocation5] sm:$0xff]
    %v45 = vld [vmem:[#allocation5 + $0x8] sm:$0xff]
    %v46 = vld [vmem:[#allocation5 + $0x10] sm:$0xff]
    %v47 = vld [vmem:[#allocation5 + $0x18] sm:$0xff]
    %v48 = vld [vmem:[%s2] sm:$0x1]
    %v50 = vlaneseq
    %v51 = vshrl.u32 %v50, 7
    %v52 = vsub.s32 0, %v51
    %v53 = vrot.slane %v48, %v52
    %vm55 = vcmask 261120
    %v57 = vsel %vm55, %v43, 0
    %59 = vmatprep.subr.mxu0 0.0
    %60 = vmatpush1.msra.mxu0 %v44
    %61 = vmatprep.subr.mxu0 0.0
    %62 = vmatpush1.msra.mxu0 %v45
    %63 = vmatprep.subr.mxu0 0.0
    %64 = vmatpush1.msra.mxu0 %v46
    %65 = vmatprep.subr.mxu0 0.0
    %66 = vmatpush1.msra.mxu0 %v47
    %67 = vmatprep.subr.mxu0 0.0
    %68 = vmatpush1.msra.mxu0 0.0
    %69 = vmatprep.subr.mxu0 0.0
    %70 = vmatpush1.msra.mxu0 0.0
    %71 = vmatprep.subr.mxu0 0.0
    %72 = vmatpush1.msra.mxu0 0.0
    %73 = vmatprep.subr.mxu0 0.0
    %74 = vmatpush1.msra.mxu0 0.0
    %75 = vmatprep.subr.mxu0 0.0
    %76 = vmatpush1.msra.mxu0 0.0
    %77 = vmatprep.subr.mxu0 0.0
    %78 = vmatpush1.msra.mxu0 0.0
    %79 = vmatprep.subr.mxu0 0.0
    %80 = vmatpush1.msra.mxu0 0.0
    %81 = vmatprep.subr.mxu0 0.0
    %82 = vmatpush1.msra.mxu0 0.0
    %83 = vmatprep.subr.mxu0 0.0
    %84 = vmatpush1.msra.mxu0 0.0
    %85 = vmatprep.subr.mxu0 0.0
    %86 = vmatpush1.msra.mxu0 0.0
    %87 = vmatprep.subr.mxu0 0.0
    %88 = vmatpush1.msra.mxu0 0.0
    %89 = vmatprep.subr.mxu0 0.0
    %90 = vmatpush1.msra.mxu0 0.0
    %91 = vmatprep.subr.mxu0 0.0
    %92 = vmatpush1.msra.mxu0 0.0
    %93 = vmatprep.subr.mxu0 0.0
    %94 = vmatpush1.msra.mxu0 0.0
    %95 = vmatprep.subr.mxu0 0.0
    %96 = vmatpush1.msra.mxu0 0.0
    %97 = vmatprep.subr.mxu0 0.0
    %98 = vmatpush1.msra.mxu0 0.0
    %99 = vmatprep.subr.mxu0 0.0
    %100 = vmatpush1.msra.mxu0 0.0
    %101 = vmatprep.subr.mxu0 0.0
    %102 = vmatpush1.msra.mxu0 0.0
    %103 = vmatprep.subr.mxu0 0.0
    %104 = vmatpush1.msra.mxu0 0.0
    %105 = vmatprep.subr.mxu0 0.0
    %106 = vmatpush1.msra.mxu0 0.0
    %107 = vmatprep.subr.mxu0 0.0
    %108 = vmatpush1.msra.mxu0 0.0
    %109 = vmatprep.subr.mxu0 0.0
    %110 = vmatpush1.msra.mxu0 0.0
    %111 = vmatprep.subr.mxu0 0.0
    %112 = vmatpush1.msra.mxu0 0.0
    %113 = vmatprep.subr.mxu0 0.0
    %114 = vmatpush1.msra.mxu0 0.0
    %115 = vmatprep.subr.mxu0 0.0
    %116 = vmatpush1.msra.mxu0 0.0
    %117 = vmatprep.subr.mxu0 0.0
    %118 = vmatpush1.msra.mxu0 0.0
    %119 = vmatprep.subr.mxu0 0.0
    %120 = vmatpush1.msra.mxu0 0.0
    %121 = vmatprep.subr.mxu0 0.0
    %122 = vmatpush1.msra.mxu0 0.0
    %123 = vmatprep.mubr.f32.mxu0 0.0
    %124 = vmatmul.mubr.f32.gmra.mrb[0].mxu0 %v57
    %v125 = vpop.f32.mrb[0].mxu0
    %v126 = vadd.f32 %v53, %v125
    %v127 = vpop.f32.mrb[0].mxu0
    %128 = vdwg.mxu0
    %129 = vst [vmem:[#allocation7] sm:$0xff] %v126
    // Predicated region
    $region22: #{_apply.1} parent=1 // pred_check
      _
    $region23: #{_apply.1} parent=1 // pred_check_branch
      %131 = sbr.rel (0) target = $region25
    $region24: #{_apply.1} parent=1 // pred_region
      %s133 = ssub.s32 128, 32
      %134 = vsyncadd [#allocation4], %s133
      %s135 = sshll.u32 [#allocation7], 4
      %s136 = int_to_ptr.vmem [resolvable:$true] %s135
      %141 = dma.vmem_to_hbm [thread:$0]  %s136, 32, %s3, [#allocation4], 32, 32, 2
    $region25: #{_apply.1} parent=1 // pred_fallthru
      _
    // Predicated region
    $region26: #{_apply.1} parent=1 // pred_check
      _
    $region27: #{_apply.1} parent=1 // pred_check_branch
      %143 = sbr.rel (0) target = $region29
    $region28: #{_apply.1} parent=1 // pred_region
      %144 = dma.done [#allocation4], 128
    $region29: #{_apply.1} parent=1 // pred_fallthru
      _
    %145 = vsyncpa [#allocation3], 1
    %146 = vsyncpa [#allocation6], 1
    %147 = vsyncpa [#allocation4], 1

</llo_original>
